<compile_context>
chip_gen: v7x
topology: tpu7x:2x2x1
jax: 0.10.0
libtpu: 0.0.40
codegen_flags: <defaults>
</compile_context>

<pallas_src>
import jax
import jax.numpy as jnp
from jax.experimental import pallas as pl
from jax.experimental.pallas import tpu as pltpu

_MIB = 1024 * 1024


def _round_up(x, m):
    return (x + m - 1) // m * m


def prepare_gated_bimodal_params(weight, bias, param_dtype=None):
    """Split / transpose the torch nn.Linear(2D, D) parameters once.

    weight: (D, 2D) torch layout; bias: (D,).
    Returns (w1, w2, b2d): w1/w2 are (D, D) acting on x1/x2; b2d is (1, D) f32.
    Hoist this out of the hot path (call once per set of weights).
    """
    D = weight.shape[0]
    assert weight.shape == (D, 2 * D)
    assert bias.shape == (D,)
    dt = param_dtype if param_dtype is not None else weight.dtype
    w1 = jnp.asarray(weight[:, :D].T, dtype=dt)   # (D, D), acts on x1
    w2 = jnp.asarray(weight[:, D:].T, dtype=dt)   # (D, D), acts on x2
    b2d = jnp.asarray(bias, dtype=jnp.float32).reshape(1, D)
    return w1, w2, b2d


def _pick_tiles(R, D, x_bytes, w_bytes, tile_rows, vmem_budget=20 * _MIB):
    # Column (output / weight-N) tile: full D when moderate; lane-aligned 512
    # otherwise so the two (D, tn) weight blocks fit v7x's halved VMEM.
    tn = D if D <= 1024 else 512

    # Row tile: as large as requested, but guarantee >= 2 row tiles whenever
    # R allows so both v7x TensorCores get work on the "parallel" row axis.
    if R < 8:
        tr = R                                   # block == full dim (valid layout)
    else:
        tr = min(int(tile_rows), max(8, _round_up(pl.cdiv(R, 2), 8)))

    def vmem_bytes(tr_, tn_):
        xin = 2 * tr_ * D * x_bytes * 2          # x1, x2 (double-buffered)
        out = tr_ * tn_ * x_bytes * 2
        wts = 2 * D * tn_ * w_bytes * 2          # w1, w2 (double-buffered)
        return xin + out + wts + 4 * tn_

    while vmem_bytes(tr, tn) > vmem_budget:
        w_only = 2 * D * tn * w_bytes * 2
        if tn > 256 and w_only > vmem_budget // 2:
            tn = max(128, (tn // 2) // 128 * 128)   # stays a multiple of 128
        elif tr > 64:
            tr = max(64, _round_up(tr // 2, 8))
        else:
            break
    return tr, tn


def _make_kernel(nj, tn):
    def kernel(x1_ref, x2_ref, w1_ref, w2_ref, b_ref, out_ref):
        # Gate logits on the MXU: native-dtype operands, f32 accumulation,
        # DEFAULT precision (single pass).  z = sigmoid(x1 @ W1 + x2 @ W2 + b).
        z_logit = (
            jnp.dot(x1_ref[...], w1_ref[...], preferred_element_type=jnp.float32)
            + jnp.dot(x2_ref[...], w2_ref[...], preferred_element_type=jnp.float32)
            + b_ref[...]
        )
        z = jax.nn.sigmoid(z_logit)                      # EUP (logistic)

        # tanh halves of h = tanh([x1, x2]); only the columns of this N tile.
        if nj == 1:
            x1c = x1_ref[...]
            x2c = x2_ref[...]
        else:
            start = pl.multiple_of(pl.program_id(1) * tn, tn)
            x1c = x1_ref[:, pl.ds(start, tn)]
            x2c = x2_ref[:, pl.ds(start, tn)]
        t1 = jnp.tanh(x1c.astype(jnp.float32))
        t2 = jnp.tanh(x2c.astype(jnp.float32))

        # out = z*t1 + (1-z)*t2  ==  t2 + z*(t1 - t2)   (one fewer mul + sub)
        out_ref[...] = (t2 + z * (t1 - t2)).astype(out_ref.dtype)

    return kernel


def gated_bimodal(x1, x2, w1, w2, b2d, *, tile_rows=512):
    """GatedBimodal forward.  x1, x2: (..., D); w1, w2: (D, D); b2d: (1, D)."""
    assert x1.shape == x2.shape, "x1 / x2 must have identical shapes"
    D = x1.shape[-1]
    assert w1.shape == (D, D) and w2.shape == (D, D) and b2d.shape == (1, D)
    orig_shape = x1.shape

    # Flatten leading dims into one lane-dense row axis.  No padding copy:
    # the ragged last row block (if any) is masked by Pallas on store.
    x1f = x1.reshape(-1, D)
    x2f = x2.reshape(-1, D)
    R = x1f.shape[0]

    x_bytes = jnp.dtype(x1.dtype).itemsize
    w_bytes = jnp.dtype(w1.dtype).itemsize
    tr, tn = _pick_tiles(R, D, x_bytes, w_bytes, tile_rows)
    ni = pl.cdiv(R, tr)
    nj = pl.cdiv(D, tn)

    x_spec = pl.BlockSpec((tr, D), lambda i, j: (i, 0))
    w_spec = pl.BlockSpec((D, tn), lambda i, j: (0, j))
    b_spec = pl.BlockSpec((1, tn), lambda i, j: (0, j))
    o_spec = pl.BlockSpec((tr, tn), lambda i, j: (i, j))

    cost = pl.CostEstimate(
        flops=4 * R * D * D + 6 * R * D,
        transcendentals=3 * R * D,
        bytes_accessed=3 * R * D * x_bytes + 2 * D * D * w_bytes + 4 * D,
    )

    out = pl.pallas_call(
        _make_kernel(nj, tn),
        out_shape=jax.ShapeDtypeStruct((R, D), x1.dtype),
        grid=(ni, nj),
        in_specs=[x_spec, x_spec, w_spec, w_spec, b_spec],
        out_specs=o_spec,
        compiler_params=pltpu.CompilerParams(
            dimension_semantics=("parallel", "parallel"),
            vmem_limit_bytes=32 * _MIB,
        ),
        cost_estimate=cost,
    )(x1f, x2f, w1, w2, b2d)

    return out.reshape(orig_shape)


def _reference(x1, x2, weight, bias):
    D = x1.shape[-1]
    x = jnp.concatenate([x1, x2], axis=-1).astype(jnp.float32)
    h = jnp.tanh(x)
    z = jax.nn.sigmoid(
        jnp.matmul(x, weight.astype(jnp.float32).T) + bias.astype(jnp.float32))
    return z * h[..., :D] + (1.0 - z) * h[..., D:]


if __name__ == "__main__":
    B, T, D = 2, 8, 32
    key = jax.random.PRNGKey(0)
    k = jax.random.split(key, 4)
    x1 = jax.random.normal(k[0], (B, T, D), dtype=jnp.float32)
    x2 = jax.random.normal(k[1], (B, T, D), dtype=jnp.float32)
    W = jax.random.normal(k[2], (D, 2 * D), dtype=jnp.float32) * 0.1
    b = jax.random.normal(k[3], (D,), dtype=jnp.float32) * 0.1

    # Hoisted weight preprocessing (done once, outside the hot path).
    w1, w2, b2d = prepare_gated_bimodal_params(W, b)

    # 3-D (B, T, D) branch of the PyTorch forward (f32).
    out = jax.block_until_ready(gated_bimodal(x1, x2, w1, w2, b2d))
    ref = _reference(x1, x2, W, b)
    assert out.shape == ref.shape
    assert jnp.allclose(out, ref, atol=5e-3, rtol=5e-3), "mismatch vs reference (3D)"

    # 2-D (B, D) branch of the PyTorch forward (f32).
    out2 = jax.block_until_ready(gated_bimodal(x1[:, 0, :], x2[:, 0, :], w1, w2, b2d))
    ref2 = _reference(x1[:, 0, :], x2[:, 0, :], W, b)
    assert jnp.allclose(out2, ref2, atol=5e-3, rtol=5e-3), "mismatch vs reference (2D)"

    # bf16 end-to-end path (activations, weights and output all bf16).
    x1b = x1.astype(jnp.bfloat16)
    x2b = x2.astype(jnp.bfloat16)
    w1b, w2b, b2db = prepare_gated_bimodal_params(W, b, param_dtype=jnp.bfloat16)
    out3 = jax.block_until_ready(gated_bimodal(x1b, x2b, w1b, w2b, b2db))
    ref3 = _reference(x1b.astype(jnp.float32), x2b.astype(jnp.float32), W, b)
    assert out3.dtype == jnp.bfloat16
    assert jnp.allclose(out3.astype(jnp.float32), ref3, atol=5e-2, rtol=5e-2), \
        "mismatch vs reference (bf16)"

    print("KERNEL_OK")
</pallas_src>

<mosaic_0001>
module attributes {stable_mosaic.version = 11 : i64} {
  func.func @kernel(%arg0: i32, %arg1: i32, %arg2: memref<8x32xf32, #tpu.memory_space<vmem>>, %arg3: memref<8x32xf32, #tpu.memory_space<vmem>>, %arg4: memref<32x32xf32, #tpu.memory_space<vmem>>, %arg5: memref<32x32xf32, #tpu.memory_space<vmem>>, %arg6: memref<1x32xf32, #tpu.memory_space<vmem>>, %arg7: memref<8x32xf32, #tpu.memory_space<vmem>>) attributes {dimension_semantics = [#tpu.dimension_semantics<parallel>, #tpu.dimension_semantics<parallel>], iteration_bounds = array<i64: 2, 1>, scalar_prefetch = 0 : i64, scratch_operands = 0 : i64, tpu.core_type = #tpu.core_type<tc>, window_params = [{transform_indices = @transform_0, window_bounds = array<i64: 8, 32>}, {transform_indices = @transform_1, window_bounds = array<i64: 8, 32>}, {transform_indices = @transform_2, window_bounds = array<i64: 32, 32>}, {transform_indices = @transform_3, window_bounds = array<i64: 32, 32>}, {transform_indices = @transform_4, window_bounds = array<i64: 1, 32>}, {transform_indices = @transform_5, window_bounds = array<i64: 8, 32>}]} {
    %c0 = arith.constant 0 : index
    %c0_0 = arith.constant 0 : index
    %0 = vector.load %arg2[%c0, %c0_0] : memref<8x32xf32, #tpu.memory_space<vmem>>, vector<8x32xf32>
    %c0_1 = arith.constant 0 : index
    %c0_2 = arith.constant 0 : index
    %1 = vector.load %arg4[%c0_1, %c0_2] : memref<32x32xf32, #tpu.memory_space<vmem>>, vector<32x32xf32>
    %cst = arith.constant dense<0.000000e+00> : vector<8x32xf32>
    %2 = tpu.matmul %0, %1, %cst {dimension_numbers = #tpu.dot_dimension_numbers<[1], [0], [0], [1], [0, 0, 1, 1], [], []>} : vector<8x32xf32>, vector<32x32xf32>, vector<8x32xf32> -> vector<8x32xf32>
    %c0_3 = arith.constant 0 : index
    %c0_4 = arith.constant 0 : index
    %3 = vector.load %arg3[%c0_3, %c0_4] : memref<8x32xf32, #tpu.memory_space<vmem>>, vector<8x32xf32>
    %c0_5 = arith.constant 0 : index
    %c0_6 = arith.constant 0 : index
    %4 = vector.load %arg5[%c0_5, %c0_6] : memref<32x32xf32, #tpu.memory_space<vmem>>, vector<32x32xf32>
    %cst_7 = arith.constant dense<0.000000e+00> : vector<8x32xf32>
    %5 = tpu.matmul %3, %4, %cst_7 {dimension_numbers = #tpu.dot_dimension_numbers<[1], [0], [0], [1], [0, 0, 1, 1], [], []>} : vector<8x32xf32>, vector<32x32xf32>, vector<8x32xf32> -> vector<8x32xf32>
    %6 = arith.addf %2, %5 : vector<8x32xf32>
    %c0_8 = arith.constant 0 : index
    %c0_9 = arith.constant 0 : index
    %7 = vector.load %arg6[%c0_8, %c0_9] : memref<1x32xf32, #tpu.memory_space<vmem>>, vector<1x32xf32>
    %8 = vector.broadcast %7 : vector<1x32xf32> to vector<8x32xf32>
    %9 = arith.addf %6, %8 : vector<8x32xf32>
    %10 = arith.negf %9 : vector<8x32xf32>
    %11 = math.exp %10 : vector<8x32xf32>
    %cst_10 = arith.constant 1.000000e+00 : f32
    %12 = vector.broadcast %cst_10 : f32 to vector<8x32xf32>
    %13 = arith.addf %12, %11 : vector<8x32xf32>
    %14 = arith.divf %12, %13 : vector<8x32xf32>
    %c0_11 = arith.constant 0 : index
    %c0_12 = arith.constant 0 : index
    %15 = vector.load %arg2[%c0_11, %c0_12] : memref<8x32xf32, #tpu.memory_space<vmem>>, vector<8x32xf32>
    %c0_13 = arith.constant 0 : index
    %c0_14 = arith.constant 0 : index
    %16 = vector.load %arg3[%c0_13, %c0_14] : memref<8x32xf32, #tpu.memory_space<vmem>>, vector<8x32xf32>
    %17 = math.tanh %15 : vector<8x32xf32>
    %18 = math.tanh %16 : vector<8x32xf32>
    %19 = arith.subf %17, %18 : vector<8x32xf32>
    %20 = arith.mulf %14, %19 : vector<8x32xf32>
    %21 = arith.addf %18, %20 : vector<8x32xf32>
    %c0_15 = arith.constant 0 : index
    %c0_16 = arith.constant 0 : index
    %22 = vector.load %arg7[%c0_15, %c0_16] : memref<8x32xf32, #tpu.memory_space<vmem>>, vector<8x32xf32>
    tpu.vector_store %arg7[%c0_15, %c0_16], %21 {strides = array<i32>} : memref<8x32xf32, #tpu.memory_space<vmem>>, vector<8x32xf32>,
    return
  }
  func.func @transform_0(%arg0: i32, %arg1: i32) -> (i32, i32) {
    %c0_i32 = arith.constant 0 : i32
    %c0_i32_0 = arith.constant 0 : i32
    return %arg0, %c0_i32 : i32, i32
  }
  func.func @transform_1(%arg0: i32, %arg1: i32) -> (i32, i32) {
    %c0_i32 = arith.constant 0 : i32
    %c0_i32_0 = arith.constant 0 : i32
    return %arg0, %c0_i32 : i32, i32
  }
  func.func @transform_2(%arg0: i32, %arg1: i32) -> (i32, i32) {
    %c0_i32 = arith.constant 0 : i32
    %c0_i32_0 = arith.constant 0 : i32
    return %c0_i32, %arg1 : i32, i32
  }
  func.func @transform_3(%arg0: i32, %arg1: i32) -> (i32, i32) {
    %c0_i32 = arith.constant 0 : i32
    %c0_i32_0 = arith.constant 0 : i32
    return %c0_i32, %arg1 : i32, i32
  }
  func.func @transform_4(%arg0: i32, %arg1: i32) -> (i32, i32) {
    %c0_i32 = arith.constant 0 : i32
    %c0_i32_0 = arith.constant 0 : i32
    return %c0_i32, %arg1 : i32, i32
  }
  func.func @transform_5(%arg0: i32, %arg1: i32) -> (i32, i32) {
    %c0_i32 = arith.constant 0 : i32
    return %arg0, %arg1 : i32, i32
  }
}

</mosaic_0001>

<llo_original>
// kernel: tpu_custom_call.1
$region0: #{tpu_custom_call.1}
  #allocation0 [shape = 'u32[]', space=smem, size = 0x4, offset = 0x4, fixed_abs, tag = 'smem constant byte address 0x4 - core index']
  #allocation1 [shape = 'u32[144,128]{1,0:T(1,128)}', space=vmem, size = 0x12000, scoped, tag = 'internal scratch']
  %s0 = inlined_call_operand.hbm [shape: f32[16,32], index: 0, kind: input, shape index: {}]
  %s1 = inlined_call_operand.hbm [shape: f32[16,32], index: 1, kind: input, shape index: {}]
  %s2 = inlined_call_operand.hbm [shape: f32[32,32], index: 2, kind: input, shape index: {}]
  %s3 = inlined_call_operand.hbm [shape: f32[32,32], index: 3, kind: input, shape index: {}]
  %s4 = inlined_call_operand.vmem [shape: f32[1,32], index: 4, kind: input, shape index: {}]
  %s5 = inlined_call_operand.hbm [shape: f32[16,32], index: 5, kind: output, shape index: {}]
  %s6 = sld [smem:[#allocation0]]
  $region69: #{tpu_custom_call.1} parent=0
    _
  %s8 = ssub.s32 1, %s6
  %s9 = scalar_select 0, %s8, %s6
  $region1: #{tpu_custom_call.1} parent=0
    #allocation2 [shape = 'u8[8192]{0}', space=vmem, size = 0x2000, scoped, tag = 'input window, operand 0']
    #allocation3 [shape = 's32[2]{0}', space=sflag, size = 0x8, scoped, tag = 'scoped memory for tpu_custom_call.1']
    #allocation4 [shape = 's32[2]{0}', space=sflag, size = 0x8, scoped, tag = 'scoped memory for tpu_custom_call.1']
    #allocation5 [shape = 'u8[8192]{0}', space=vmem, size = 0x2000, scoped, tag = 'input window, operand 1']
    #allocation6 [shape = 's32[2]{0}', space=sflag, size = 0x8, scoped, tag = 'scoped memory for tpu_custom_call.1']
    #allocation7 [shape = 'u8[16384]{0}', space=vmem, size = 0x4000, scoped, tag = 'input window, operand 2, single buffered']
    #allocation8 [shape = 'u8[16384]{0}', space=vmem, size = 0x4000, scoped, tag = 'input window, operand 3, single buffered']
    #allocation9 [shape = 's32[1]{0}', space=sflag, size = 0x4, scoped, tag = 'scoped memory for tpu_custom_call.1']
    #allocation10 [shape = 'u8[8192]{0}', space=vmem, size = 0x2000, scoped, tag = 'output window, operand 0']
    %10 = vsyncpa [#allocation3], 0
    %s11 = scalar_lea.sflag [#allocation3], 1
    %12 = vsyncpa %s11, 0
    %13 = vsyncpa [#allocation6], 0
    %s14 = scalar_lea.sflag [#allocation6], 1
    %15 = vsyncpa %s14, 0
    %16 = vsyncpa [#allocation9], 0
    %17 = vsyncpa [#allocation4], 0
    %s18 = scalar_lea.sflag [#allocation4], 1
    %19 = vsyncpa %s18, 0
    loop: start=0, step=1, limit=4
    $region2: #{tpu_custom_call.1} parent=1 // loop_pre_header
      _
    $region3: #{tpu_custom_call.1} parent=1 // loop_header
      %s21 = sphi 0, %s25
      %p22 = scmp.ge.s32.totalorder %s21, 4
      %s28 = sphi 0, %s40
      %s29 = sphi 0, %s36
      %s30 = sphi 0, %s28
      %s31 = sphi 0, %s29
      %s32 = sphi 0, %s30
      %s33 = sphi 0, %s31
      %s43 = sphi 0, %s45
      %s46 = sphi 0, %s43
      %s47 = sphi 0, %s46
      %s63 = sphi 0, %s47
      %s69 = sphi 0, %s71
      %s72 = sphi 0, %s69
      %s73 = sphi 0, %s72
      %s89 = sphi 0, %s73
      %s95 = sphi 0, %s97
      %s98 = sphi 0, %s95
      %s99 = sphi 0, %s98
      %s115 = sphi 0, %s99
      %s121 = sphi 0, %s123
      %s124 = sphi 0, %s121
      %s125 = sphi 0, %s124
      %s141 = sphi 0, %s125
      %s147 = sphi 0, %s149
      %s150 = sphi 0, %s147
      %s151 = sphi 0, %s150
      %s167 = sphi 0, %s151
      %s175 = sphi 0, %s177
      %s178 = sphi 0, %s175
      %s179 = sphi 0, %s178
      %s195 = sphi 0, %s179
    $region4: #{tpu_custom_call.1} parent=1 // loop_header_branch
      %24 = sbr.rel (%p22) target = $region8
    $region5: #{tpu_custom_call.1} parent=1 // loop_body
      %s26 = ssub.s32 %s21, 1
      %s27 = ssub.s32 %s21, 2
      %s34 = sadd.s32 1, %s29
      %p35 = scmp.ge.s32.totalorder %s34, 1
      %s36 = scalar_select %p35, 0, %s34
      %s37 = sadd.s32 1, %s28
      %s38 = scalar_select %p35, %s37, %s28
      %p39 = scmp.ge.s32.totalorder %s38, 2
      %s40 = scalar_select %p39, 0, %s38
      %s41 = ssub.s32 %s28, %s40
      %p42 = scmp.eq.s32.totalorder %s41, 0
      %s44 = sadd.s32 %s43, 1
      %s45 = scalar_select %p42, %s43, %s44
      %p48 = pneg %p42
      %p49 = scmp.eq.s32.totalorder %s21, 1
      %p50 = por %p48, %p49
      %p51 = scmp.ne.s32.totalorder %s43, %s46
      %p52 = scmp.eq.s32.totalorder %s21, 0
      %p53 = por %p51, %p52
      %p54 = scmp.ne.s32.totalorder %s43, %s46
      %p55 = scmp.eq.s32.totalorder %s26, 1
      %p56 = por %p54, %p55
      %p57 = scmp.ne.s32.totalorder %s46, %s47
      %p58 = scmp.eq.s32.totalorder %s26, 0
      %p59 = por %p57, %p58
      %p60 = scmp.ne.s32.totalorder %s46, %s47
      %p61 = scmp.eq.s32.totalorder %s27, 1
      %p62 = por %p60, %p61
      %p64 = scmp.ne.s32.totalorder %s47, %s63
      %p65 = scmp.eq.s32.totalorder %s27, 0
      %p66 = por %p64, %p65
      %s67 = ssub.s32 %s28, %s40
      %p68 = scmp.eq.s32.totalorder %s67, 0
      %s70 = sadd.s32 %s69, 1
      %s71 = scalar_select %p68, %s69, %s70
      %p74 = pneg %p68
      %p75 = scmp.eq.s32.totalorder %s21, 1
      %p76 = por %p74, %p75
      %p77 = scmp.ne.s32.totalorder %s69, %s72
      %p78 = scmp.eq.s32.totalorder %s21, 0
      %p79 = por %p77, %p78
      %p80 = scmp.ne.s32.totalorder %s69, %s72
      %p81 = scmp.eq.s32.totalorder %s26, 1
      %p82 = por %p80, %p81
      %p83 = scmp.ne.s32.totalorder %s72, %s73
      %p84 = scmp.eq.s32.totalorder %s26, 0
      %p85 = por %p83, %p84
      %p86 = scmp.ne.s32.totalorder %s72, %s73
      %p87 = scmp.eq.s32.totalorder %s27, 1
      %p88 = por %p86, %p87
      %p90 = scmp.ne.s32.totalorder %s73, %s89
      %p91 = scmp.eq.s32.totalorder %s27, 0
      %p92 = por %p90, %p91
      %s93 = ssub.s32 %s29, %s36
      %p94 = scmp.eq.s32.totalorder %s93, 0
      %s96 = sadd.s32 %s95, 1
      %s97 = scalar_select %p94, %s95, %s96
      %p100 = pneg %p94
      %p101 = scmp.eq.s32.totalorder %s21, 1
      %p102 = por %p100, %p101
      %p103 = scmp.ne.s32.totalorder %s95, %s98
      %p104 = scmp.eq.s32.totalorder %s21, 0
      %p105 = por %p103, %p104
      %p106 = scmp.ne.s32.totalorder %s95, %s98
      %p107 = scmp.eq.s32.totalorder %s26, 1
      %p108 = por %p106, %p107
      %p109 = scmp.ne.s32.totalorder %s98, %s99
      %p110 = scmp.eq.s32.totalorder %s26, 0
      %p111 = por %p109, %p110
      %p112 = scmp.ne.s32.totalorder %s98, %s99
      %p113 = scmp.eq.s32.totalorder %s27, 1
      %p114 = por %p112, %p113
      %p116 = scmp.ne.s32.totalorder %s99, %s115
      %p117 = scmp.eq.s32.totalorder %s27, 0
      %p118 = por %p116, %p117
      %s119 = ssub.s32 %s29, %s36
      %p120 = scmp.eq.s32.totalorder %s119, 0
      %s122 = sadd.s32 %s121, 1
      %s123 = scalar_select %p120, %s121, %s122
      %p126 = pneg %p120
      %p127 = scmp.eq.s32.totalorder %s21, 1
      %p128 = por %p126, %p127
      %p129 = scmp.ne.s32.totalorder %s121, %s124
      %p130 = scmp.eq.s32.totalorder %s21, 0
      %p131 = por %p129, %p130
      %p132 = scmp.ne.s32.totalorder %s121, %s124
      %p133 = scmp.eq.s32.totalorder %s26, 1
      %p134 = por %p132, %p133
      %p135 = scmp.ne.s32.totalorder %s124, %s125
      %p136 = scmp.eq.s32.totalorder %s26, 0
      %p137 = por %p135, %p136
      %p138 = scmp.ne.s32.totalorder %s124, %s125
      %p139 = scmp.eq.s32.totalorder %s27, 1
      %p140 = por %p138, %p139
      %p142 = scmp.ne.s32.totalorder %s125, %s141
      %p143 = scmp.eq.s32.totalorder %s27, 0
      %p144 = por %p142, %p143
      %s145 = ssub.s32 %s29, %s36
      %p146 = scmp.eq.s32.totalorder %s145, 0
      %s148 = sadd.s32 %s147, 1
      %s149 = scalar_select %p146, %s147, %s148
      %p152 = pneg %p146
      %p153 = scmp.eq.s32.totalorder %s21, 1
      %p154 = por %p152, %p153
      %p155 = scmp.ne.s32.totalorder %s147, %s150
      %p156 = scmp.eq.s32.totalorder %s21, 0
      %p157 = por %p155, %p156
      %p158 = scmp.ne.s32.totalorder %s147, %s150
      %p159 = scmp.eq.s32.totalorder %s26, 1
      %p160 = por %p158, %p159
      %p161 = scmp.ne.s32.totalorder %s150, %s151
      %p162 = scmp.eq.s32.totalorder %s26, 0
      %p163 = por %p161, %p162
      %p164 = scmp.ne.s32.totalorder %s150, %s151
      %p165 = scmp.eq.s32.totalorder %s27, 1
      %p166 = por %p164, %p165
      %p168 = scmp.ne.s32.totalorder %s151, %s167
      %p169 = scmp.eq.s32.totalorder %s27, 0
      %p170 = por %p168, %p169
      %s171 = ssub.s32 %s28, %s40
      %s172 = ssub.s32 %s29, %s36
      %s173 = sor.u32 %s171, %s172
      %p174 = scmp.eq.s32.totalorder %s173, 0
      %s176 = sadd.s32 %s175, 1
      %s177 = scalar_select %p174, %s175, %s176
      %p180 = pneg %p174
      %p181 = scmp.eq.s32.totalorder %s21, 1
      %p182 = por %p180, %p181
      %p183 = scmp.ne.s32.totalorder %s175, %s178
      %p184 = scmp.eq.s32.totalorder %s21, 0
      %p185 = por %p183, %p184
      %p186 = scmp.ne.s32.totalorder %s175, %s178
      %p187 = scmp.eq.s32.totalorder %s26, 1
      %p188 = por %p186, %p187
      %p189 = scmp.ne.s32.totalorder %s178, %s179
      %p190 = scmp.eq.s32.totalorder %s26, 0
      %p191 = por %p189, %p190
      %p192 = scmp.ne.s32.totalorder %s178, %s179
      %p193 = scmp.eq.s32.totalorder %s27, 1
      %p194 = por %p192, %p193
      %p196 = scmp.ne.s32.totalorder %s179, %s195
      %p197 = scmp.eq.s32.totalorder %s27, 0
      %p198 = por %p196, %p197
      %p199 = scmp.le.s32.totalorder 1, %s21
      %p200 = scmp.lt.s32.totalorder %s21, 3
      %p201 = pnand %p199, %p200
      %p202 = pneg %p201
      // Predicated region
      $region9: #{tpu_custom_call.1} parent=5 // pred_check
        _
      $region10: #{tpu_custom_call.1} parent=5 // pred_check_branch
        %204 = sbr.rel (%p201) target = $region12
      $region11: #{tpu_custom_call.1} parent=5 // pred_region
        %s205 = ssub.s32 %s21, 1
        // Predicated region
        $region13: #{tpu_custom_call.1} parent=11 // pred_check
          %p206 = pneg %p111
        $region14: #{tpu_custom_call.1} parent=11 // pred_check_branch
          %208 = sbr.rel (%p206) target = $region16
        $region15: #{tpu_custom_call.1} parent=11 // pred_region
          %s210 = ssub.s32 512, 512
          %211 = vsyncadd [#allocation6], %s210
          %s212 = smul.addr %s31, 128
          %s213 = scalar_lea.hbm %s2, %s212
          %s214 = sshll.u32 [#allocation7], 4
          %s215 = int_to_ptr.vmem [resolvable:$true] %s214
          %220 = dma.hbm_to_vmem [thread:$0]  %s213, 512, %s215, [#allocation6], 128, 128, 8
        $region16: #{tpu_custom_call.1} parent=11 // pred_fallthru
          _
        // Predicated region
        $region17: #{tpu_custom_call.1} parent=11 // pred_check
          %p221 = pneg %p137
        $region18: #{tpu_custom_call.1} parent=11 // pred_check_branch
          %223 = sbr.rel (%p221) target = $region20
        $region19: #{tpu_custom_call.1} parent=11 // pred_region
          %s225 = ssub.s32 512, 512
          %226 = vsyncadd [#allocation9], %s225
          %s227 = smul.addr %s31, 128
          %s228 = scalar_lea.hbm %s3, %s227
          %s229 = sshll.u32 [#allocation8], 4
          %s230 = int_to_ptr.vmem [resolvable:$true] %s229
          %235 = dma.hbm_to_vmem [thread:$0]  %s228, 512, %s230, [#allocation9], 128, 128, 8
        $region20: #{tpu_custom_call.1} parent=11 // pred_fallthru
          _
        // Predicated region
        $region21: #{tpu_custom_call.1} parent=11 // pred_check
          %p236 = pneg %p163
        $region22: #{tpu_custom_call.1} parent=11 // pred_check_branch
          %238 = sbr.rel (%p236) target = $region24
        $region23: #{tpu_custom_call.1} parent=11 // pred_region
          %p239 = scmp.lt.s32.totalorder %s31, 0
          %s240 = scalar_select %p239, %s31, 0
          %s241 = scalar_lea.vmem %s4, %s240
        $region24: #{tpu_custom_call.1} parent=11 // pred_fallthru
          _
      $region12: #{tpu_custom_call.1} parent=5 // pred_fallthru
        _
      %p242 = scmp.lt.s32.totalorder %s21, 2
      // Predicated region
      $region25: #{tpu_custom_call.1} parent=5 // pred_check
        %p243 = pneg %p242
      $region26: #{tpu_custom_call.1} parent=5 // pred_check_branch
        %245 = sbr.rel (%p243) target = $region28
      $region27: #{tpu_custom_call.1} parent=5 // pred_region
        // Predicated region
        $region29: #{tpu_custom_call.1} parent=27 // pred_check
          %p246 = pneg %p53
        $region30: #{tpu_custom_call.1} parent=27 // pred_check_branch
          %248 = sbr.rel (%p246) target = $region32
        $region31: #{tpu_custom_call.1} parent=27 // pred_region
          %s249 = sand.u32 %s43, 1
          %s250 = scalar_lea.sflag [#allocation3], %s249
          %s251 = sand.u32 %s43, 1
          %s252 = smul.addr %s251, 8
          %s253 = scalar_lea.vmem [#allocation2], %s252
          %s255 = ssub.s32 128, 128
          %256 = vsyncadd %s250, %s255
          %s257 = smul.addr %s28, 128
          %s258 = scalar_lea.hbm %s0, %s257
          %s260 = sshll.u32 %s253, 4
          %s261 = int_to_ptr.vmem [resolvable:$true] %s260
          %263 = dma.hbm_to_vmem [thread:$0]  %s258, 128, %s261, %s250
        $region32: #{tpu_custom_call.1} parent=27 // pred_fallthru
          _
        // Predicated region
        $region33: #{tpu_custom_call.1} parent=27 // pred_check
          %p264 = pneg %p79
        $region34: #{tpu_custom_call.1} parent=27 // pred_check_branch
          %266 = sbr.rel (%p264) target = $region36
        $region35: #{tpu_custom_call.1} parent=27 // pred_region
          %s267 = sand.u32 %s21, 1
          %s268 = scalar_lea.sflag [#allocation6], %s267
          %s269 = sand.u32 %s69, 1
          %s270 = smul.addr %s269, 8
          %s271 = scalar_lea.vmem [#allocation5], %s270
          %s273 = ssub.s32 128, 128
          %274 = vsyncadd %s268, %s273
          %s275 = smul.addr %s28, 128
          %s276 = scalar_lea.hbm %s1, %s275
          %s278 = sshll.u32 %s271, 4
          %s279 = int_to_ptr.vmem [resolvable:$true] %s278
          %281 = dma.hbm_to_vmem [thread:$0]  %s276, 128, %s279, %s268
        $region36: #{tpu_custom_call.1} parent=27 // pred_fallthru
          _
      $region28: #{tpu_custom_call.1} parent=5 // pred_fallthru
        _
      %p282 = scmp.le.s32.totalorder 1, %s21
      %p283 = scmp.lt.s32.totalorder %s21, 3
      %p284 = pnand %p282, %p283
      %p285 = pneg %p284
      // Predicated region
      $region37: #{tpu_custom_call.1} parent=5 // pred_check
        _
      $region38: #{tpu_custom_call.1} parent=5 // pred_check_branch
        %287 = sbr.rel (%p284) target = $region40
      $region39: #{tpu_custom_call.1} parent=5 // pred_region
        %s288 = ssub.s32 %s21, 1
        %s289 = sand.u32 %s46, 1
        %s290 = scalar_lea.sflag [#allocation3], %s289
        %s291 = sand.u32 %s46, 1
        %s292 = smul.addr %s291, 8
        %s293 = scalar_lea.vmem [#allocation2], %s292
        // Predicated region
        $region41: #{tpu_custom_call.1} parent=39 // pred_check
          %p294 = pneg %p59
        $region42: #{tpu_custom_call.1} parent=39 // pred_check_branch
          %296 = sbr.rel (%p294) target = $region44
        $region43: #{tpu_custom_call.1} parent=39 // pred_region
          %297 = dma.done %s290, 128
        $region44: #{tpu_custom_call.1} parent=39 // pred_fallthru
          _
        %s298 = sand.u32 %s26, 1
        %s299 = scalar_lea.sflag [#allocation6], %s298
        %s300 = sand.u32 %s72, 1
        %s301 = smul.addr %s300, 8
        %s302 = scalar_lea.vmem [#allocation5], %s301
        // Predicated region
        $region45: #{tpu_custom_call.1} parent=39 // pred_check
          %p303 = pneg %p85
        $region46: #{tpu_custom_call.1} parent=39 // pred_check_branch
          %305 = sbr.rel (%p303) target = $region48
        $region47: #{tpu_custom_call.1} parent=39 // pred_region
          %306 = dma.done %s299, 128
        $region48: #{tpu_custom_call.1} parent=39 // pred_fallthru
          _
        // Predicated region
        $region49: #{tpu_custom_call.1} parent=39 // pred_check
          %p307 = pneg %p111
        $region50: #{tpu_custom_call.1} parent=39 // pred_check_branch
          %309 = sbr.rel (%p307) target = $region52
        $region51: #{tpu_custom_call.1} parent=39 // pred_region
          %310 = dma.done [#allocation6], 512
        $region52: #{tpu_custom_call.1} parent=39 // pred_fallthru
          _
        // Predicated region
        $region53: #{tpu_custom_call.1} parent=39 // pred_check
          %p311 = pneg %p137
        $region54: #{tpu_custom_call.1} parent=39 // pred_check_branch
          %313 = sbr.rel (%p311) target = $region56
        $region55: #{tpu_custom_call.1} parent=39 // pred_region
          %314 = dma.done [#allocation9], 512
        $region56: #{tpu_custom_call.1} parent=39 // pred_fallthru
          _
        %s315 = sand.u32 %s46, 1
        %s316 = scalar_lea.sflag [#allocation3], %s315
        %s317 = sand.u32 %s46, 1
        %s318 = smul.addr %s317, 8
        %s319 = scalar_lea.vmem [#allocation2], %s318
        %p320 = pneg %p59
        %p321 = pneg %p56
        %s322 = sand.u32 %s26, 1
        %s323 = scalar_lea.sflag [#allocation6], %s322
        %s324 = sand.u32 %s72, 1
        %s325 = smul.addr %s324, 8
        %s326 = scalar_lea.vmem [#allocation5], %s325
        %p327 = pneg %p85
        %p328 = pneg %p82
        %p329 = pneg %p111
        %p330 = pneg %p108
        %p331 = pneg %p137
        %p332 = pneg %p134
        %p333 = scmp.lt.s32.totalorder %s31, 0
        %s334 = scalar_select %p333, %s31, 0
        %s335 = scalar_lea.vmem %s4, %s334
        %p336 = pneg %p163
        %p337 = pneg %p160
        %p338 = pneg %p191
        %p339 = pneg %p188
        %s340 = sand.u32 %s178, 1
        %s341 = scalar_lea.sflag [#allocation4], %s340
        %s342 = sand.u32 %s178, 1
        %s343 = smul.addr %s342, 8
        %s344 = scalar_lea.vmem [#allocation10], %s343
        %p345 = scmp.lt.s32.totalorder %s31, 0
        %s346 = scalar_select %p345, %s31, 0
        %s347 = scalar_lea.vmem %s4, %s346
        %v348 = vld [vmem:[%s293] sm:$0xff]
        %v349 = vld [vmem:[#allocation7] sm:$0xff]
        %v350 = vld [vmem:[#allocation7 + $0x8] sm:$0xff]
        %v351 = vld [vmem:[#allocation7 + $0x10] sm:$0xff]
        %v352 = vld [vmem:[#allocation7 + $0x18] sm:$0xff]
        %v353 = vld [vmem:[%s302] sm:$0xff]
        %v354 = vld [vmem:[#allocation8] sm:$0xff]
        %v355 = vld [vmem:[#allocation8 + $0x8] sm:$0xff]
        %v356 = vld [vmem:[#allocation8 + $0x10] sm:$0xff]
        %v357 = vld [vmem:[#allocation8 + $0x18] sm:$0xff]
        %vm358 = vcmask 261120
        %v360 = vsel %vm358, %v353, 0
        %362 = vmatprep.subr.mxu0 0.0
        %363 = vmatpush1.msra.mxu0 %v354
        %364 = vmatprep.subr.mxu0 0.0
        %365 = vmatpush1.msra.mxu0 %v355
        %366 = vmatprep.subr.mxu0 0.0
        %367 = vmatpush1.msra.mxu0 %v356
        %368 = vmatprep.subr.mxu0 0.0
        %369 = vmatpush1.msra.mxu0 %v357
        %370 = vmatprep.subr.mxu0 0.0
        %371 = vmatpush1.msra.mxu0 0.0
        %372 = vmatprep.subr.mxu0 0.0
        %373 = vmatpush1.msra.mxu0 0.0
        %374 = vmatprep.subr.mxu0 0.0
        %375 = vmatpush1.msra.mxu0 0.0
        %376 = vmatprep.subr.mxu0 0.0
        %377 = vmatpush1.msra.mxu0 0.0
        %378 = vmatprep.subr.mxu0 0.0
        %379 = vmatpush1.msra.mxu0 0.0
        %380 = vmatprep.subr.mxu0 0.0
        %381 = vmatpush1.msra.mxu0 0.0
        %382 = vmatprep.subr.mxu0 0.0
        %383 = vmatpush1.msra.mxu0 0.0
        %384 = vmatprep.subr.mxu0 0.0
        %385 = vmatpush1.msra.mxu0 0.0
        %386 = vmatprep.subr.mxu0 0.0
        %387 = vmatpush1.msra.mxu0 0.0
        %388 = vmatprep.subr.mxu0 0.0
        %389 = vmatpush1.msra.mxu0 0.0
        %390 = vmatprep.subr.mxu0 0.0
        %391 = vmatpush1.msra.mxu0 0.0
        %392 = vmatprep.subr.mxu0 0.0
        %393 = vmatpush1.msra.mxu0 0.0
        %394 = vmatprep.subr.mxu0 0.0
        %395 = vmatpush1.msra.mxu0 0.0
        %396 = vmatprep.subr.mxu0 0.0
        %397 = vmatpush1.msra.mxu0 0.0
        %398 = vmatprep.subr.mxu0 0.0
        %399 = vmatpush1.msra.mxu0 0.0
        %400 = vmatprep.subr.mxu0 0.0
        %401 = vmatpush1.msra.mxu0 0.0
        %402 = vmatprep.subr.mxu0 0.0
        %403 = vmatpush1.msra.mxu0 0.0
        %404 = vmatprep.subr.mxu0 0.0
        %405 = vmatpush1.msra.mxu0 0.0
        %406 = vmatprep.subr.mxu0 0.0
        %407 = vmatpush1.msra.mxu0 0.0
        %408 = vmatprep.subr.mxu0 0.0
        %409 = vmatpush1.msra.mxu0 0.0
        %410 = vmatprep.subr.mxu0 0.0
        %411 = vmatpush1.msra.mxu0 0.0
        %412 = vmatprep.subr.mxu0 0.0
        %413 = vmatpush1.msra.mxu0 0.0
        %414 = vmatprep.subr.mxu0 0.0
        %415 = vmatpush1.msra.mxu0 0.0
        %416 = vmatprep.subr.mxu0 0.0
        %417 = vmatpush1.msra.mxu0 0.0
        %418 = vmatprep.subr.mxu0 0.0
        %419 = vmatpush1.msra.mxu0 0.0
        %420 = vmatprep.subr.mxu0 0.0
        %421 = vmatpush1.msra.mxu0 0.0
        %422 = vmatprep.subr.mxu0 0.0
        %423 = vmatpush1.msra.mxu0 0.0
        %424 = vmatprep.subr.mxu0 0.0
        %425 = vmatpush1.msra.mxu0 0.0
        %426 = vmatprep.mubr.f32.mxu0 0.0
        %427 = vmatmul.mubr.f32.gmra.mrb[0].mxu0 %v360
        %v428 = vpop.f32.mrb[0].mxu0
        %v429 = vadd.f32 0.0, %v428
        %v430 = vpop.f32.mrb[0].mxu0
        %431 = vdwg.mxu0
        %v433 = vsel %vm358, %v348, 0
        %435 = vmatprep.subr.mxu0 0.0
        %436 = vmatpush1.msra.mxu0 %v349
        %437 = vmatprep.subr.mxu0 0.0
        %438 = vmatpush1.msra.mxu0 %v350
        %439 = vmatprep.subr.mxu0 0.0
        %440 = vmatpush1.msra.mxu0 %v351
        %441 = vmatprep.subr.mxu0 0.0
        %442 = vmatpush1.msra.mxu0 %v352
        %443 = vmatprep.subr.mxu0 0.0
        %444 = vmatpush1.msra.mxu0 0.0
        %445 = vmatprep.subr.mxu0 0.0
        %446 = vmatpush1.msra.mxu0 0.0
        %447 = vmatprep.subr.mxu0 0.0
        %448 = vmatpush1.msra.mxu0 0.0
        %449 = vmatprep.subr.mxu0 0.0
        %450 = vmatpush1.msra.mxu0 0.0
        %451 = vmatprep.subr.mxu0 0.0
        %452 = vmatpush1.msra.mxu0 0.0
        %453 = vmatprep.subr.mxu0 0.0
        %454 = vmatpush1.msra.mxu0 0.0
        %455 = vmatprep.subr.mxu0 0.0
        %456 = vmatpush1.msra.mxu0 0.0
        %457 = vmatprep.subr.mxu0 0.0
        %458 = vmatpush1.msra.mxu0 0.0
        %459 = vmatprep.subr.mxu0 0.0
        %460 = vmatpush1.msra.mxu0 0.0
        %461 = vmatprep.subr.mxu0 0.0
        %462 = vmatpush1.msra.mxu0 0.0
        %463 = vmatprep.subr.mxu0 0.0
        %464 = vmatpush1.msra.mxu0 0.0
        %465 = vmatprep.subr.mxu0 0.0
        %466 = vmatpush1.msra.mxu0 0.0
        %467 = vmatprep.subr.mxu0 0.0
        %468 = vmatpush1.msra.mxu0 0.0
        %469 = vmatprep.subr.mxu0 0.0
        %470 = vmatpush1.msra.mxu0 0.0
        %471 = vmatprep.subr.mxu0 0.0
        %472 = vmatpush1.msra.mxu0 0.0
        %473 = vmatprep.subr.mxu0 0.0
        %474 = vmatpush1.msra.mxu0 0.0
        %475 = vmatprep.subr.mxu0 0.0
        %476 = vmatpush1.msra.mxu0 0.0
        %477 = vmatprep.subr.mxu0 0.0
        %478 = vmatpush1.msra.mxu0 0.0
        %479 = vmatprep.subr.mxu0 0.0
        %480 = vmatpush1.msra.mxu0 0.0
        %481 = vmatprep.subr.mxu0 0.0
        %482 = vmatpush1.msra.mxu0 0.0
        %483 = vmatprep.subr.mxu0 0.0
        %484 = vmatpush1.msra.mxu0 0.0
        %485 = vmatprep.subr.mxu0 0.0
        %486 = vmatpush1.msra.mxu0 0.0
        %487 = vmatprep.subr.mxu0 0.0
        %488 = vmatpush1.msra.mxu0 0.0
        %489 = vmatprep.subr.mxu0 0.0
        %490 = vmatpush1.msra.mxu0 0.0
        %491 = vmatprep.subr.mxu0 0.0
        %492 = vmatpush1.msra.mxu0 0.0
        %493 = vmatprep.subr.mxu0 0.0
        %494 = vmatpush1.msra.mxu0 0.0
        %495 = vmatprep.subr.mxu0 0.0
        %496 = vmatpush1.msra.mxu0 0.0
        %497 = vmatprep.subr.mxu0 0.0
        %498 = vmatpush1.msra.mxu0 0.0
        %499 = vmatprep.mubr.f32.mxu0 0.0
        %500 = vmatmul.mubr.f32.gmra.mrb[0].mxu0 %v433
        %v501 = vpop.f32.mrb[0].mxu0
        %v502 = vadd.f32 %v429, %v501
        %v503 = vpop.f32.mrb[0].mxu0
        %504 = vdwg.mxu0
        %v505 = vld [vmem:[%s347] sm:$0x1]
        %v507 = vlaneseq
        %v508 = vshrl.u32 %v507, 7
        %v509 = vsub.s32 0, %v508
        %v510 = vrot.slane %v505, %v509
        %v512 = vadd.f32 %v502, %v510
        %v513 = vxor.u32 %v512, 2147483648
        %v514 = vmul.f32 %v513, 1.442695
        %v515 = vpow.pop %v514
        %v516 = vadd.f32 %v515, 1.0
        %v517 = vrcp.pop %v516
        %v518 = vmul.f32 1.0, %v517
        %v519 = vtanh.pop %v348
        %v520 = vtanh.pop %v353
        %v521 = vsub.f32 %v519, %v520
        %v522 = vmul.f32 %v518, %v521
        %v523 = vadd.f32 %v520, %v522
        %524 = vst.msk [vmem:[%s344] sm:$0xff] %vm358, %v523
        %s525 = sand.u32 %s178, 1
        %s526 = scalar_lea.sflag [#allocation4], %s525
        %s527 = sand.u32 %s178, 1
        %s528 = smul.addr %s527, 8
        %s529 = scalar_lea.vmem [#allocation10], %s528
        // Predicated region
        $region57: #{tpu_custom_call.1} parent=39 // pred_check
          %p530 = pneg %p188
        $region58: #{tpu_custom_call.1} parent=39 // pred_check_branch
          %532 = sbr.rel (%p530) target = $region60
        $region59: #{tpu_custom_call.1} parent=39 // pred_region
          %s534 = ssub.s32 128, 128
          %535 = vsyncadd %s526, %s534
          %s536 = sadd.s32 %s31, %s30
          %s537 = smul.addr %s536, 128
          %s538 = scalar_lea.hbm %s5, %s537
          %s540 = sshll.u32 %s529, 4
          %s541 = int_to_ptr.vmem [resolvable:$true] %s540
          %543 = dma.vmem_to_hbm [thread:$0]  %s541, 128, %s538, %s526
        $region60: #{tpu_custom_call.1} parent=39 // pred_fallthru
          _
      $region40: #{tpu_custom_call.1} parent=5 // pred_fallthru
        _
      %p544 = scmp.le.s32.totalorder 2, %s21
      // Predicated region
      $region61: #{tpu_custom_call.1} parent=5 // pred_check
        %p545 = pneg %p544
      $region62: #{tpu_custom_call.1} parent=5 // pred_check_branch
        %547 = sbr.rel (%p545) target = $region64
      $region63: #{tpu_custom_call.1} parent=5 // pred_region
        %s548 = ssub.s32 %s21, 2
        // Predicated region
        $region65: #{tpu_custom_call.1} parent=63 // pred_check
          %p549 = pneg %p194
        $region66: #{tpu_custom_call.1} parent=63 // pred_check_branch
          %551 = sbr.rel (%p549) target = $region68
        $region67: #{tpu_custom_call.1} parent=63 // pred_region
          %s552 = sand.u32 %s179, 1
          %s553 = scalar_lea.sflag [#allocation4], %s552
          %s554 = sand.u32 %s179, 1
          %s555 = smul.addr %s554, 8
          %s556 = scalar_lea.vmem [#allocation10], %s555
          %557 = dma.done %s553, 128
        $region68: #{tpu_custom_call.1} parent=63 // pred_fallthru
          _
      $region64: #{tpu_custom_call.1} parent=5 // pred_fallthru
        _
    $region6: #{tpu_custom_call.1} parent=1 // loop_footer
      %s25 = sadd.s32 1, %s21
    $region7: #{tpu_custom_call.1} parent=1 // loop_footer_branch
      %20 = sbr.rel target = $region3
    $region8: #{tpu_custom_call.1} parent=1 // loop_exit
      _
    %558 = vsyncpa [#allocation3], 1
    %s559 = scalar_lea.sflag [#allocation3], 1
    %560 = vsyncpa %s559, 1
    %561 = vsyncpa [#allocation6], 1
    %s562 = scalar_lea.sflag [#allocation6], 1
    %563 = vsyncpa %s562, 1
    %564 = vsyncpa [#allocation9], 1
    %565 = vsyncpa [#allocation4], 1
    %s566 = scalar_lea.sflag [#allocation4], 1
    %567 = vsyncpa %s566, 1

</llo_original>
